<compile_context>
chip_gen: v6e
topology: v6e:2x2x1
jax: 0.10.0
libtpu: 0.0.40
codegen_flags: <defaults>
</compile_context>

<pallas_src>
import functools

import jax
import jax.numpy as jnp
from jax import lax
from jax.experimental import pallas as pl
from jax.experimental.pallas import tpu as pltpu


def _round_up(x: int, m: int) -> int:
    return (x + m - 1) // m * m


def _pick_time_chunk(T: int, max_chunk: int = 32) -> int:
    """Pick the in-kernel time-chunk length.

    Prefer a divisor of T (no per-step validity mask needed); otherwise use
    max_chunk and mask the padded tail steps inside the kernel.
    """
    tc = min(T, max_chunk)
    if T % tc == 0:
        return tc
    for cand in range(tc, 7, -1):
        if T % cand == 0:
            return cand
    return tc


def _make_cornn_kernel(dt: float, gamma: float, epsilon: float, *,
                       n_hid_p: int, tc: int, T: int, matmul_dtype):
    """Pallas kernel closure with the cell's scalar hyperparams folded in."""
    c = 1.0 - dt * epsilon          # coefficient of hz
    g = dt * gamma                  # coefficient of hy
    need_mask = (T % tc) != 0       # padded tail timesteps must be no-ops

    def kernel(u_ref, hy0_ref, hz0_ref, w_ref, hy_out_ref, hz_out_ref, s_sc):
        t_blk = pl.program_id(1)

        # Load the initial state into the contiguous [hy | hz] VMEM carry on
        # the first time chunk of this batch tile.
        @pl.when(t_blk == 0)
        def _():
            s_sc[:, :n_hid_p] = hy0_ref[...].astype(jnp.float32)
            s_sc[:, n_hid_p:] = hz0_ref[...].astype(jnp.float32)

        def step(i, carry):
            s = s_sc[...]                       # (TB, 2*n_hid_p) f32, no concat
            hy = s[:, :n_hid_p]
            hz = s[:, n_hid_p:]
            # Single MXU matmul against the resident fused recurrent weights;
            # the hoisted input projection u_t is added afterwards in f32.
            pre = jnp.dot(s.astype(matmul_dtype), w_ref[...],
                          preferred_element_type=jnp.float32) + u_ref[i]
            hz_new = c * hz + dt * jnp.tanh(pre) - g * hy
            hy_new = hy + dt * hz_new
            if need_mask:
                valid = (t_blk * tc + i) < T
                hy_new = jnp.where(valid, hy_new, hy)
                hz_new = jnp.where(valid, hz_new, hz)
            s_sc[:, :n_hid_p] = hy_new
            s_sc[:, n_hid_p:] = hz_new
            return carry

        lax.fori_loop(0, tc, step, 0, unroll=True)

        # Write back to HBM only after the last time chunk.
        @pl.when(t_blk == pl.num_programs(1) - 1)
        def _():
            hy_out_ref[...] = s_sc[:, :n_hid_p].astype(hy_out_ref.dtype)
            hz_out_ref[...] = s_sc[:, n_hid_p:].astype(hz_out_ref.dtype)

    return kernel


@functools.partial(jax.jit,
                   static_argnames=("dt", "gamma", "epsilon", "use_bf16_matmul"))
def cornn_sequence(x_seq, hy0, hz0, wi, bi, w1, w2, *,
                   dt, gamma, epsilon, use_bf16_matmul=False):
    """Run T coRNNCell steps with the time loop inside one Pallas kernel.

    Args:
      x_seq: [T, B, n_inp] inputs (one per timestep).
      hy0, hz0: [B, n_hid] initial state.
      wi: [n_hid, n_inp], bi: [n_hid]   (i2h, PyTorch layout)
      w1, w2: [n_hid, n_hid]            (h2h1 / h2h2, PyTorch layout, no bias)
      use_bf16_matmul: cast weights/activations to bf16 for the recurrent
        matmul (f32 accumulation, f32 state carry).  Recommended on v6e/v7x.
    Returns:
      (hy_T, hz_T), both [B, n_hid].
    """
    T, B, n_inp = x_seq.shape
    del n_inp
    n_hid = hy0.shape[1]
    matmul_dtype = jnp.bfloat16 if use_bf16_matmul else jnp.float32

    # Lane padding: 256-multiples fill the full MXU column width on v6e/v7x;
    # the extra <=128 zero columns are harmless on v5e.  Small n_hid keeps 128.
    n_hid_p = _round_up(n_hid, 256 if n_hid >= 256 else 128)

    # Batch tiling: >= 2 tiles whenever possible so v7x's second TensorCore
    # gets work on the "parallel" batch axis; cap tile rows at 256.
    B_p = _round_up(B, 8)
    if B_p >= 16:
        TB = min(256, _round_up(B_p // 2, 8))
        B_p = _round_up(B_p, TB)
    else:
        TB = B_p

    # In-kernel time chunking.
    tc = _pick_time_chunk(T)
    T_p = _round_up(T, tc)

    # --- Hoisted, state-independent input projection: one big parallel matmul
    # outside the serialized recurrence. ---
    u = (x_seq.astype(jnp.float32) @ wi.T.astype(jnp.float32)
         + bi.astype(jnp.float32))                          # (T, B, n_hid)
    u_p = jnp.pad(u, ((0, T_p - T), (0, B_p - B), (0, n_hid_p - n_hid)))

    hy_p = jnp.pad(hy0, ((0, B_p - B), (0, n_hid_p - n_hid)))
    hz_p = jnp.pad(hz0, ((0, B_p - B), (0, n_hid_p - n_hid)))

    # Recurrent weights stacked along K to match the state layout [hy | hz].
    def pad_t(w):
        wt = w.T
        return jnp.pad(wt, ((0, n_hid_p - wt.shape[0]),
                            (0, n_hid_p - wt.shape[1])))
    w_cat = jnp.concatenate([pad_t(w1), pad_t(w2)], axis=0).astype(matmul_dtype)

    kernel = _make_cornn_kernel(float(dt), float(gamma), float(epsilon),
                                n_hid_p=n_hid_p, tc=tc, T=T,
                                matmul_dtype=matmul_dtype)

    # VMEM budget: resident buffers + headroom (default scoped limit is only
    # 16 MiB on v5e / 32 MiB on v6e,v7x).
    out_itemsize = jnp.dtype(hy0.dtype).itemsize
    w_itemsize = jnp.dtype(matmul_dtype).itemsize
    resident = (
        2 * n_hid_p * n_hid_p * w_itemsize            # weights (single buffer)
        + 2 * tc * TB * n_hid_p * 4                   # u blocks (double buffer)
        + 2 * 2 * TB * n_hid_p * 4                    # hy0/hz0 blocks
        + 2 * 2 * TB * n_hid_p * out_itemsize         # output blocks
        + TB * 2 * n_hid_p * 4                        # state scratch
    )
    vmem_limit = int(min(128 * 1024 * 1024, max(32 * 1024 * 1024, 2 * resident)))

    hy_out, hz_out = pl.pallas_call(
        kernel,
        out_shape=(
            jax.ShapeDtypeStruct((B_p, n_hid_p), hy0.dtype),
            jax.ShapeDtypeStruct((B_p, n_hid_p), hz0.dtype),
        ),
        grid_spec=pltpu.PrefetchScalarGridSpec(
            num_scalar_prefetch=0,
            grid=(B_p // TB, T_p // tc),
            in_specs=[
                # u_t streamed one time chunk per grid step.
                pl.BlockSpec((tc, TB, n_hid_p), lambda b, t: (t, b, 0)),
                # Initial state: one DMA per batch tile, read only at t == 0.
                pl.BlockSpec((TB, n_hid_p), lambda b, t: (b, 0)),
                pl.BlockSpec((TB, n_hid_p), lambda b, t: (b, 0)),
                # Fused recurrent weights: VMEM-resident, single-buffered.
                pl.BlockSpec((2 * n_hid_p, n_hid_p), lambda b, t: (0, 0),
                             pipeline_mode=pl.Buffered(1)),
            ],
            out_specs=(
                pl.BlockSpec((TB, n_hid_p), lambda b, t: (b, 0)),
                pl.BlockSpec((TB, n_hid_p), lambda b, t: (b, 0)),
            ),
            scratch_shapes=[
                # Contiguous [hy | hz] f32 state carry (the matmul LHS).
                pltpu.VMEM((TB, 2 * n_hid_p), jnp.float32),
            ],
        ),
        compiler_params=pltpu.CompilerParams(
            dimension_semantics=("parallel", "arbitrary"),
            vmem_limit_bytes=vmem_limit,
        ),
    )(u_p, hy_p, hz_p, w_cat)

    return hy_out[:B, :n_hid], hz_out[:B, :n_hid]


def cornn_cell(x, hy, hz, wi, bi, w1, w2, *, dt, gamma, epsilon,
               use_bf16_matmul=False):
    """Single coRNNCell step (exact semantics of the PyTorch module forward)."""
    return cornn_sequence(x[None], hy, hz, wi, bi, w1, w2,
                          dt=dt, gamma=gamma, epsilon=epsilon,
                          use_bf16_matmul=use_bf16_matmul)


# ----------------------------------------------------------------------------
# Pure-JAX references (mirror the PyTorch forward exactly).
# ----------------------------------------------------------------------------
def cornn_cell_ref(x, hy, hz, wi, bi, w1, w2, *, dt, gamma, epsilon):
    pre = hy @ w1.T + hz @ w2.T + x @ wi.T + bi
    hz = hz + dt * (jnp.tanh(pre) - gamma * hy - epsilon * hz)
    hy = hy + dt * hz
    return hy, hz


def cornn_sequence_ref(x_seq, hy, hz, wi, bi, w1, w2, *, dt, gamma, epsilon):
    for t in range(x_seq.shape[0]):
        hy, hz = cornn_cell_ref(x_seq[t], hy, hz, wi, bi, w1, w2,
                                dt=dt, gamma=gamma, epsilon=epsilon)
    return hy, hz


if __name__ == "__main__":
    # Small, deterministic problem (synthetic params; no checkpoint loading).
    T, B, n_inp, n_hid = 8, 8, 32, 64
    dt, gamma, epsilon = 0.042, 2.7, 4.7

    key = jax.random.PRNGKey(0)
    kx, khy, khz, kwi, kbi, kw1, kw2 = jax.random.split(key, 7)

    x_seq = jax.random.normal(kx, (T, B, n_inp), dtype=jnp.float32)
    hy0 = jax.random.normal(khy, (B, n_hid), dtype=jnp.float32)
    hz0 = jax.random.normal(khz, (B, n_hid), dtype=jnp.float32)

    # PyTorch nn.Linear default init: U(-1/sqrt(fan_in), 1/sqrt(fan_in)).
    def linear_init(k, fan_in, shape):
        bound = 1.0 / (fan_in ** 0.5)
        return jax.random.uniform(k, shape, jnp.float32, -bound, bound)

    wi = linear_init(kwi, n_inp, (n_hid, n_inp))      # i2h.weight  [out, in]
    bi = linear_init(kbi, n_inp, (n_hid,))            # i2h.bias
    w1 = linear_init(kw1, n_hid, (n_hid, n_hid))      # h2h1.weight (no bias)
    w2 = linear_init(kw2, n_hid, (n_hid, n_hid))      # h2h2.weight (no bias)

    # --- single cell step (module forward semantics), f32 matmul path ---
    hy1, hz1 = cornn_cell(x_seq[0], hy0, hz0, wi, bi, w1, w2,
                          dt=dt, gamma=gamma, epsilon=epsilon)
    jax.block_until_ready((hy1, hz1))
    hy1_ref, hz1_ref = cornn_cell_ref(x_seq[0], hy0, hz0, wi, bi, w1, w2,
                                      dt=dt, gamma=gamma, epsilon=epsilon)
    assert jnp.allclose(hy1, hy1_ref, atol=1e-4, rtol=1e-4)
    assert jnp.allclose(hz1, hz1_ref, atol=1e-4, rtol=1e-4)

    # --- full T-step recurrence, time loop (chunked) inside the kernel ---
    hyT, hzT = cornn_sequence(x_seq, hy0, hz0, wi, bi, w1, w2,
                              dt=dt, gamma=gamma, epsilon=epsilon)
    jax.block_until_ready((hyT, hzT))
    hyT_ref, hzT_ref = cornn_sequence_ref(x_seq, hy0, hz0, wi, bi, w1, w2,
                                          dt=dt, gamma=gamma, epsilon=epsilon)
    assert jnp.allclose(hyT, hyT_ref, atol=1e-4, rtol=1e-4)
    assert jnp.allclose(hzT, hzT_ref, atol=1e-4, rtol=1e-4)

    # --- bf16 MXU path (v6e/v7x): f32 state carry, looser tolerance ---
    hyTb, hzTb = cornn_sequence(x_seq, hy0, hz0, wi, bi, w1, w2,
                                dt=dt, gamma=gamma, epsilon=epsilon,
                                use_bf16_matmul=True)
    jax.block_until_ready((hyTb, hzTb))
    assert jnp.allclose(hyTb, hyT_ref, atol=5e-2, rtol=5e-2)
    assert jnp.allclose(hzTb, hzT_ref, atol=5e-2, rtol=5e-2)

    print("KERNEL_OK")
</pallas_src>

<mosaic_0001>
module attributes {stable_mosaic.version = 11 : i64} {
  func.func @kernel(%arg0: i32, %arg1: i32, %arg2: memref<1x8x128xf32, #tpu.memory_space<vmem>>, %arg3: memref<8x128xf32, #tpu.memory_space<vmem>>, %arg4: memref<8x128xf32, #tpu.memory_space<vmem>>, %arg5: memref<256x128xf32, #tpu.memory_space<vmem>>, %arg6: memref<8x128xf32, #tpu.memory_space<vmem>>, %arg7: memref<8x128xf32, #tpu.memory_space<vmem>>, %arg8: memref<8x256xf32, #tpu.memory_space<vmem>>) attributes {dimension_semantics = [#tpu.dimension_semantics<parallel>, #tpu.dimension_semantics<arbitrary>], iteration_bounds = array<i64: 1, 1>, scalar_prefetch = 0 : i64, scratch_operands = 1 : i64, tpu.core_type = #tpu.core_type<tc>, window_params = [{transform_indices = @transform_0, window_bounds = array<i64: 1, 8, 128>}, {transform_indices = @transform_1, window_bounds = array<i64: 8, 128>}, {transform_indices = @transform_2, window_bounds = array<i64: 8, 128>}, {pipeline_mode = #tpu.pipeline_mode<synchronous>, transform_indices = @transform_3, window_bounds = array<i64: 256, 128>}, {transform_indices = @transform_4, window_bounds = array<i64: 8, 128>}, {transform_indices = @transform_5, window_bounds = array<i64: 8, 128>}]} {
    %c0_i32 = arith.constant 0 : i32
    %0 = arith.cmpi eq, %arg1, %c0_i32 : i32
    %1 = arith.extui %0 : i1 to i32
    %c0_i32_0 = arith.constant 0 : i32
    %2 = arith.cmpi ne, %1, %c0_i32_0 : i32
    scf.if %2 {
      %c0_16 = arith.constant 0 : index
      %c0_17 = arith.constant 0 : index
      %29 = vector.load %arg3[%c0_16, %c0_17] : memref<8x128xf32, #tpu.memory_space<vmem>>, vector<8x128xf32>
      %c0_18 = arith.constant 0 : index
      %c0_19 = arith.constant 0 : index
      %30 = vector.load %arg8[%c0_18, %c0_19] : memref<8x256xf32, #tpu.memory_space<vmem>>, vector<8x128xf32>
      tpu.vector_store %arg8[%c0_18, %c0_19], %29 {strides = array<i32>} : memref<8x256xf32, #tpu.memory_space<vmem>>, vector<8x128xf32>,
      %c0_20 = arith.constant 0 : index
      %c0_21 = arith.constant 0 : index
      %31 = vector.load %arg4[%c0_20, %c0_21] : memref<8x128xf32, #tpu.memory_space<vmem>>, vector<8x128xf32>
      %c0_22 = arith.constant 0 : index
      %c128_23 = arith.constant 128 : index
      %32 = vector.load %arg8[%c0_22, %c128_23] : memref<8x256xf32, #tpu.memory_space<vmem>>, vector<8x128xf32>
      tpu.vector_store %arg8[%c0_22, %c128_23], %31 {strides = array<i32>} : memref<8x256xf32, #tpu.memory_space<vmem>>, vector<8x128xf32>,
    } else {
    }
    %c0_i32_1 = arith.constant 0 : i32
    %c0 = arith.constant 0 : index
    %c0_2 = arith.constant 0 : index
    %3 = vector.load %arg8[%c0, %c0_2] : memref<8x256xf32, #tpu.memory_space<vmem>>, vector<8x256xf32>
    %4 = vector.extract_strided_slice %3 {offsets = [0, 0], sizes = [8, 128], strides = [1, 1]} : vector<8x256xf32> to vector<8x128xf32>
    %5 = vector.extract_strided_slice %3 {offsets = [0, 128], sizes = [8, 128], strides = [1, 1]} : vector<8x256xf32> to vector<8x128xf32>
    %c0_3 = arith.constant 0 : index
    %c0_4 = arith.constant 0 : index
    %6 = vector.load %arg5[%c0_3, %c0_4] : memref<256x128xf32, #tpu.memory_space<vmem>>, vector<256x128xf32>
    %cst = arith.constant dense<0.000000e+00> : vector<8x128xf32>
    %7 = tpu.matmul %3, %6, %cst {dimension_numbers = #tpu.dot_dimension_numbers<[1], [0], [0], [1], [0, 0, 1, 1], [], []>} : vector<8x256xf32>, vector<256x128xf32>, vector<8x128xf32> -> vector<8x128xf32>
    %8 = arith.index_cast %c0_i32_1 : i32 to index
    %c0_5 = arith.constant 0 : index
    %c0_6 = arith.constant 0 : index
    %9 = vector.load %arg2[%8, %c0_5, %c0_6] : memref<1x8x128xf32, #tpu.memory_space<vmem>>, vector<1x8x128xf32>
    %10 = vector.shape_cast %9 : vector<1x8x128xf32> to vector<8x128xf32>
    %11 = arith.addf %7, %10 : vector<8x128xf32>
    %cst_7 = arith.constant 8.026000e-01 : f32
    %12 = vector.broadcast %cst_7 : f32 to vector<8x128xf32>
    %13 = arith.mulf %12, %5 : vector<8x128xf32>
    %14 = math.tanh %11 : vector<8x128xf32>
    %cst_8 = arith.constant 4.200000e-02 : f32
    %15 = vector.broadcast %cst_8 : f32 to vector<8x128xf32>
    %16 = arith.mulf %15, %14 : vector<8x128xf32>
    %17 = arith.addf %13, %16 : vector<8x128xf32>
    %cst_9 = arith.constant 1.134000e-01 : f32
    %18 = vector.broadcast %cst_9 : f32 to vector<8x128xf32>
    %19 = arith.mulf %18, %4 : vector<8x128xf32>
    %20 = arith.subf %17, %19 : vector<8x128xf32>
    %cst_10 = arith.constant 4.200000e-02 : f32
    %21 = vector.broadcast %cst_10 : f32 to vector<8x128xf32>
    %22 = arith.mulf %21, %20 : vector<8x128xf32>
    %23 = arith.addf %4, %22 : vector<8x128xf32>
    %c0_11 = arith.constant 0 : index
    %c0_12 = arith.constant 0 : index
    %24 = vector.load %arg8[%c0_11, %c0_12] : memref<8x256xf32, #tpu.memory_space<vmem>>, vector<8x128xf32>
    tpu.vector_store %arg8[%c0_11, %c0_12], %23 {strides = array<i32>} : memref<8x256xf32, #tpu.memory_space<vmem>>, vector<8x128xf32>,
    %c0_13 = arith.constant 0 : index
    %c128 = arith.constant 128 : index
    %25 = vector.load %arg8[%c0_13, %c128] : memref<8x256xf32, #tpu.memory_space<vmem>>, vector<8x128xf32>
    tpu.vector_store %arg8[%c0_13, %c128], %20 {strides = array<i32>} : memref<8x256xf32, #tpu.memory_space<vmem>>, vector<8x128xf32>,
    %c1_i32 = arith.constant 1 : i32
    %c0_i32_14 = arith.constant 0 : i32
    %26 = arith.cmpi eq, %arg1, %c0_i32_14 : i32
    %27 = arith.extui %26 : i1 to i32
    %c0_i32_15 = arith.constant 0 : i32
    %28 = arith.cmpi ne, %27, %c0_i32_15 : i32
    scf.if %28 {
      %c0_16 = arith.constant 0 : index
      %c0_17 = arith.constant 0 : index
      %29 = vector.load %arg8[%c0_16, %c0_17] : memref<8x256xf32, #tpu.memory_space<vmem>>, vector<8x128xf32>
      %c0_18 = arith.constant 0 : index
      %c0_19 = arith.constant 0 : index
      %30 = vector.load %arg6[%c0_18, %c0_19] : memref<8x128xf32, #tpu.memory_space<vmem>>, vector<8x128xf32>
      tpu.vector_store %arg6[%c0_18, %c0_19], %29 {strides = array<i32>} : memref<8x128xf32, #tpu.memory_space<vmem>>, vector<8x128xf32>,
      %c0_20 = arith.constant 0 : index
      %c128_21 = arith.constant 128 : index
      %31 = vector.load %arg8[%c0_20, %c128_21] : memref<8x256xf32, #tpu.memory_space<vmem>>, vector<8x128xf32>
      %c0_22 = arith.constant 0 : index
      %c0_23 = arith.constant 0 : index
      %32 = vector.load %arg7[%c0_22, %c0_23] : memref<8x128xf32, #tpu.memory_space<vmem>>, vector<8x128xf32>
      tpu.vector_store %arg7[%c0_22, %c0_23], %31 {strides = array<i32>} : memref<8x128xf32, #tpu.memory_space<vmem>>, vector<8x128xf32>,
    } else {
    }
    return
  }
  func.func @transform_0(%arg0: i32, %arg1: i32) -> (i32, i32, i32) {
    %c0_i32 = arith.constant 0 : i32
    %c0_i32_0 = arith.constant 0 : i32
    return %arg1, %arg0, %c0_i32 : i32, i32, i32
  }
  func.func @transform_1(%arg0: i32, %arg1: i32) -> (i32, i32) {
    %c0_i32 = arith.constant 0 : i32
    %c0_i32_0 = arith.constant 0 : i32
    return %arg0, %c0_i32 : i32, i32
  }
  func.func @transform_2(%arg0: i32, %arg1: i32) -> (i32, i32) {
    %c0_i32 = arith.constant 0 : i32
    %c0_i32_0 = arith.constant 0 : i32
    return %arg0, %c0_i32 : i32, i32
  }
  func.func @transform_3(%arg0: i32, %arg1: i32) -> (i32, i32) {
    %c0_i32 = arith.constant 0 : i32
    %c0_i32_0 = arith.constant 0 : i32
    %c0_i32_1 = arith.constant 0 : i32
    return %c0_i32, %c0_i32_0 : i32, i32
  }
  func.func @transform_4(%arg0: i32, %arg1: i32) -> (i32, i32) {
    %c0_i32 = arith.constant 0 : i32
    %c0_i32_0 = arith.constant 0 : i32
    return %arg0, %c0_i32 : i32, i32
  }
  func.func @transform_5(%arg0: i32, %arg1: i32) -> (i32, i32) {
    %c0_i32 = arith.constant 0 : i32
    %c0_i32_0 = arith.constant 0 : i32
    return %arg0, %c0_i32 : i32, i32
  }
}

</mosaic_0001>

<llo_original>
// kernel: cornn_sequence.1
$region0: #{cornn_sequence.1}
  #allocation0 [shape = 'u32[]', space=smem, size = 0x4, offset = 0x4, fixed_abs, tag = 'smem constant byte address 0x4 - core index']
  #allocation1 [shape = 'u32[144,128]{1,0:T(1,128)}', space=vmem, size = 0x12000, scoped, tag = 'internal scratch']
  #allocation2 [shape = 'f32[8,256]{1,0:T(8,128)}', space=vmem, size = 0x2000, scoped, tag = 'scratch operand']
  %s0 = inlined_call_operand.vmem [shape: f32[1,8,128], index: 0, kind: input, shape index: {}]
  %s1 = inlined_call_operand.vmem [shape: f32[8,128], index: 1, kind: input, shape index: {}]
  %s2 = inlined_call_operand.vmem [shape: f32[8,128], index: 2, kind: input, shape index: {}]
  %s3 = inlined_call_operand.vmem [shape: f32[256,128], index: 3, kind: input, shape index: {}]
  %s4 = inlined_call_operand.hbm [shape: f32[8,128], index: 4, kind: output, shape index: {0}]
  %s5 = inlined_call_operand.hbm [shape: f32[8,128], index: 5, kind: output, shape index: {1}]
  %6 = xla_tuple %s4, %s5
  %s7 = sld [smem:[#allocation0]]
  $region42: #{cornn_sequence.1} parent=0
    _
  %s9 = ssub.s32 1, %s7
  %s10 = scalar_select 0, %s9, %s7
  $region1: #{cornn_sequence.1} parent=0
    #allocation3 [shape = 'u8[4096]{0}', space=vmem, size = 0x1000, scoped, tag = 'output window, operand 0, single buffered']
    #allocation4 [shape = 's32[1]{0}', space=sflag, size = 0x4, scoped, tag = 'scoped memory for cornn_sequence.1']
    #allocation5 [shape = 'u8[4096]{0}', space=vmem, size = 0x1000, scoped, tag = 'output window, operand 1, single buffered']
    #allocation6 [shape = 's32[1]{0}', space=sflag, size = 0x4, scoped, tag = 'scoped memory for cornn_sequence.1']
    %11 = vsyncpa [#allocation4], 0
    %12 = vsyncpa [#allocation6], 0
    // Predicated region
    $region2: #{cornn_sequence.1} parent=1 // pred_check
      _
    $region3: #{cornn_sequence.1} parent=1 // pred_check_branch
      %14 = sbr.rel (0) target = $region5
    $region4: #{cornn_sequence.1} parent=1 // pred_region
      _
    $region5: #{cornn_sequence.1} parent=1 // pred_fallthru
      _
    // Predicated region
    $region6: #{cornn_sequence.1} parent=1 // pred_check
      _
    $region7: #{cornn_sequence.1} parent=1 // pred_check_branch
      %16 = sbr.rel (0) target = $region9
    $region8: #{cornn_sequence.1} parent=1 // pred_region
      _
    $region9: #{cornn_sequence.1} parent=1 // pred_fallthru
      _
    // Predicated region
    $region10: #{cornn_sequence.1} parent=1 // pred_check
      _
    $region11: #{cornn_sequence.1} parent=1 // pred_check_branch
      %18 = sbr.rel (0) target = $region13
    $region12: #{cornn_sequence.1} parent=1 // pred_region
      _
    $region13: #{cornn_sequence.1} parent=1 // pred_fallthru
      _
    // Predicated region
    $region14: #{cornn_sequence.1} parent=1 // pred_check
      _
    $region15: #{cornn_sequence.1} parent=1 // pred_check_branch
      %20 = sbr.rel (0) target = $region17
    $region16: #{cornn_sequence.1} parent=1 // pred_region
      _
    $region17: #{cornn_sequence.1} parent=1 // pred_fallthru
      _
    %p21 = scmp.eq.s32.totalorder 0, 0
    // Predicated region
    $region18: #{cornn_sequence.1} parent=1 // pred_check
      %p22 = pneg %p21
    $region19: #{cornn_sequence.1} parent=1 // pred_check_branch
      %24 = sbr.rel (%p22) target = $region21
    $region20: #{cornn_sequence.1} parent=1 // pred_region
      %v25 = vld [vmem:[%s1] sm:$0xff]
      %26 = vst [vmem:[#allocation2] sm:$0xff] %v25
      %v27 = vld [vmem:[%s2] sm:$0xff]
      %28 = vst [vmem:[#allocation2 + $0x8] sm:$0xff] %v27
    $region21: #{cornn_sequence.1} parent=1 // pred_fallthru
      _
    %v29 = vld [vmem:[#allocation2] sm:$0xff]
    %v30 = vld [vmem:[#allocation2 + $0x8] sm:$0xff]
    %v31 = vld [vmem:[%s3] sm:$0xff]
    %v32 = vld [vmem:[%s3 + $0x8] sm:$0xff]
    %v33 = vld [vmem:[%s3 + $0x10] sm:$0xff]
    %v34 = vld [vmem:[%s3 + $0x18] sm:$0xff]
    %v35 = vld [vmem:[%s3 + $0x20] sm:$0xff]
    %v36 = vld [vmem:[%s3 + $0x28] sm:$0xff]
    %v37 = vld [vmem:[%s3 + $0x30] sm:$0xff]
    %v38 = vld [vmem:[%s3 + $0x38] sm:$0xff]
    %v39 = vld [vmem:[%s3 + $0x40] sm:$0xff]
    %v40 = vld [vmem:[%s3 + $0x48] sm:$0xff]
    %v41 = vld [vmem:[%s3 + $0x50] sm:$0xff]
    %v42 = vld [vmem:[%s3 + $0x58] sm:$0xff]
    %v43 = vld [vmem:[%s3 + $0x60] sm:$0xff]
    %v44 = vld [vmem:[%s3 + $0x68] sm:$0xff]
    %v45 = vld [vmem:[%s3 + $0x70] sm:$0xff]
    %v46 = vld [vmem:[%s3 + $0x78] sm:$0xff]
    %v47 = vld [vmem:[%s3 + $0x80] sm:$0xff]
    %v48 = vld [vmem:[%s3 + $0x88] sm:$0xff]
    %v49 = vld [vmem:[%s3 + $0x90] sm:$0xff]
    %v50 = vld [vmem:[%s3 + $0x98] sm:$0xff]
    %v51 = vld [vmem:[%s3 + $0xa0] sm:$0xff]
    %v52 = vld [vmem:[%s3 + $0xa8] sm:$0xff]
    %v53 = vld [vmem:[%s3 + $0xb0] sm:$0xff]
    %v54 = vld [vmem:[%s3 + $0xb8] sm:$0xff]
    %v55 = vld [vmem:[%s3 + $0xc0] sm:$0xff]
    %v56 = vld [vmem:[%s3 + $0xc8] sm:$0xff]
    %v57 = vld [vmem:[%s3 + $0xd0] sm:$0xff]
    %v58 = vld [vmem:[%s3 + $0xd8] sm:$0xff]
    %v59 = vld [vmem:[%s3 + $0xe0] sm:$0xff]
    %v60 = vld [vmem:[%s3 + $0xe8] sm:$0xff]
    %v61 = vld [vmem:[%s3 + $0xf0] sm:$0xff]
    %v62 = vld [vmem:[%s3 + $0xf8] sm:$0xff]
    %v63 = vld [vmem:[%s0] sm:$0xff]
    %64 = vmatprep.subr.mxu0 0.0
    %65 = vmatpush1.msra.mxu0 %v46
    %66 = vmatprep.subr.mxu0 0.0
    %67 = vmatpush1.msra.mxu0 %v45
    %68 = vmatprep.subr.mxu0 0.0
    %69 = vmatpush1.msra.mxu0 %v44
    %70 = vmatprep.subr.mxu0 0.0
    %71 = vmatpush1.msra.mxu0 %v43
    %72 = vmatprep.subr.mxu0 0.0
    %73 = vmatpush1.msra.mxu0 %v42
    %74 = vmatprep.subr.mxu0 0.0
    %75 = vmatpush1.msra.mxu0 %v41
    %76 = vmatprep.subr.mxu0 0.0
    %77 = vmatpush1.msra.mxu0 %v40
    %78 = vmatprep.subr.mxu0 0.0
    %79 = vmatpush1.msra.mxu0 %v39
    %80 = vmatprep.subr.mxu0 0.0
    %81 = vmatpush1.msra.mxu0 %v38
    %82 = vmatprep.subr.mxu0 0.0
    %83 = vmatpush1.msra.mxu0 %v37
    %84 = vmatprep.subr.mxu0 0.0
    %85 = vmatpush1.msra.mxu0 %v36
    %86 = vmatprep.subr.mxu0 0.0
    %87 = vmatpush1.msra.mxu0 %v35
    %88 = vmatprep.subr.mxu0 0.0
    %89 = vmatpush1.msra.mxu0 %v34
    %90 = vmatprep.subr.mxu0 0.0
    %91 = vmatpush1.msra.mxu0 %v33
    %92 = vmatprep.subr.mxu0 0.0
    %93 = vmatpush1.msra.mxu0 %v32
    %94 = vmatprep.subr.mxu0 0.0
    %95 = vmatpush1.msra.mxu0 %v31
    %96 = vmatprep.subr.mxu0 0.0
    %97 = vmatpush2.msra.mxu0 %v62
    %98 = vmatprep.subr.mxu0 0.0
    %99 = vmatpush2.msra.mxu0 %v61
    %100 = vmatprep.subr.mxu0 0.0
    %101 = vmatpush2.msra.mxu0 %v60
    %102 = vmatprep.subr.mxu0 0.0
    %103 = vmatpush2.msra.mxu0 %v59
    %104 = vmatprep.subr.mxu0 0.0
    %105 = vmatpush2.msra.mxu0 %v58
    %106 = vmatprep.subr.mxu0 0.0
    %107 = vmatpush2.msra.mxu0 %v57
    %108 = vmatprep.subr.mxu0 0.0
    %109 = vmatpush2.msra.mxu0 %v56
    %110 = vmatprep.subr.mxu0 0.0
    %111 = vmatpush2.msra.mxu0 %v55
    %112 = vmatprep.subr.mxu0 0.0
    %113 = vmatpush2.msra.mxu0 %v54
    %114 = vmatprep.subr.mxu0 0.0
    %115 = vmatpush2.msra.mxu0 %v53
    %116 = vmatprep.subr.mxu0 0.0
    %117 = vmatpush2.msra.mxu0 %v52
    %118 = vmatprep.subr.mxu0 0.0
    %119 = vmatpush2.msra.mxu0 %v51
    %120 = vmatprep.subr.mxu0 0.0
    %121 = vmatpush2.msra.mxu0 %v50
    %122 = vmatprep.subr.mxu0 0.0
    %123 = vmatpush2.msra.mxu0 %v49
    %124 = vmatprep.subr.mxu0 0.0
    %125 = vmatpush2.msra.mxu0 %v48
    %126 = vmatprep.subr.mxu0 0.0
    %127 = vmatpush2.msra.mxu0 %v47
    %128 = vmatprep.mubr.f32.mxu0 %v30
    %129 = vmatmul.mubr.f32.gmra.mxu0 %v29
    %v130 = vpop.f32.mrf.mxu0
    %v131 = vadd.f32 %v63, %v130
    %v132 = vpop.f32.mrf.mxu0
    %133 = vdwg.mxu0
    %v134 = vmul.f32 %v30, 0.8026
    %v135 = vtanh.pop %v131
    %v136 = vmul.f32 %v135, 0.042
    %v137 = vadd.f32 %v134, %v136
    %v138 = vmul.f32 %v29, 0.1134
    %v139 = vsub.f32 %v137, %v138
    %v140 = vmul.f32 %v139, 0.042
    %v141 = vadd.f32 %v29, %v140
    %142 = vst [vmem:[#allocation2] sm:$0xff] %v141
    %143 = vst [vmem:[#allocation2 + $0x8] sm:$0xff] %v139
    // Predicated region
    $region22: #{cornn_sequence.1} parent=1 // pred_check
      %p144 = pneg %p21
    $region23: #{cornn_sequence.1} parent=1 // pred_check_branch
      %146 = sbr.rel (%p144) target = $region25
    $region24: #{cornn_sequence.1} parent=1 // pred_region
      %v147 = vld [vmem:[#allocation2] sm:$0xff]
      %148 = vst [vmem:[#allocation3] sm:$0xff] %v147
      %v149 = vld [vmem:[#allocation2 + $0x8] sm:$0xff]
      %150 = vst [vmem:[#allocation5] sm:$0xff] %v149
    $region25: #{cornn_sequence.1} parent=1 // pred_fallthru
      _
    // Predicated region
    $region26: #{cornn_sequence.1} parent=1 // pred_check
      _
    $region27: #{cornn_sequence.1} parent=1 // pred_check_branch
      %152 = sbr.rel (0) target = $region29
    $region28: #{cornn_sequence.1} parent=1 // pred_region
      %s154 = ssub.s32 128, 128
      %155 = vsyncadd [#allocation4], %s154
      %s157 = sshll.u32 [#allocation3], 4
      %s158 = int_to_ptr.vmem [resolvable:$true] %s157
      %160 = dma.vmem_to_hbm [thread:$0]  %s158, 128, %s4, [#allocation4]
    $region29: #{cornn_sequence.1} parent=1 // pred_fallthru
      _
    // Predicated region
    $region30: #{cornn_sequence.1} parent=1 // pred_check
      _
    $region31: #{cornn_sequence.1} parent=1 // pred_check_branch
      %162 = sbr.rel (0) target = $region33
    $region32: #{cornn_sequence.1} parent=1 // pred_region
      %s164 = ssub.s32 128, 128
      %165 = vsyncadd [#allocation6], %s164
      %s167 = sshll.u32 [#allocation5], 4
      %s168 = int_to_ptr.vmem [resolvable:$true] %s167
      %170 = dma.vmem_to_hbm [thread:$0]  %s168, 128, %s5, [#allocation6]
    $region33: #{cornn_sequence.1} parent=1 // pred_fallthru
      _
    // Predicated region
    $region34: #{cornn_sequence.1} parent=1 // pred_check
      _
    $region35: #{cornn_sequence.1} parent=1 // pred_check_branch
      %172 = sbr.rel (0) target = $region37
    $region36: #{cornn_sequence.1} parent=1 // pred_region
      %173 = dma.done [#allocation4], 128
    $region37: #{cornn_sequence.1} parent=1 // pred_fallthru
      _
    // Predicated region
    $region38: #{cornn_sequence.1} parent=1 // pred_check
      _
    $region39: #{cornn_sequence.1} parent=1 // pred_check_branch
      %175 = sbr.rel (0) target = $region41
    $region40: #{cornn_sequence.1} parent=1 // pred_region
      %176 = dma.done [#allocation6], 128
    $region41: #{cornn_sequence.1} parent=1 // pred_fallthru
      _
    %177 = vsyncpa [#allocation4], 1
    %178 = vsyncpa [#allocation6], 1

</llo_original>
